<compile_context>
chip_gen: v7x
topology: tpu7x:2x2x1
jax: 0.10.0
libtpu: 0.0.40
codegen_flags: <defaults>
</compile_context>

<pallas_src>
import functools

import jax
import jax.numpy as jnp
from jax.experimental import pallas as pl
from jax.experimental.pallas import tpu as pltpu


def _round_up(n, m):
    return ((n + m - 1) // m) * m


def _pad_to(a, axis, mult):
    pad = (-a.shape[axis]) % mult
    if pad == 0:
        return a
    widths = [(0, 0)] * a.ndim
    widths[axis] = (0, pad)
    return jnp.pad(a, widths)


def _svdquant_kernel(x_ref, wt_ref, b_ref, ae_t_ref, bt_ref, o_ref, xa_ref,
                     *, reuse_xa_across_j):
    # x_ref:    (tm, tk)       activations tile (bf16)
    # wt_ref:   (tk, tn)       base (dequantized) weight, transposed (bf16)
    # b_ref:    (1, tn)        base bias (f32)
    # ae_t_ref: (Kp, r_pad)    full (lora_A * lora_E).T, VMEM-resident (bf16)
    # bt_ref:   (r_pad, tn)    lora_B.T with scaling/(ranknum+eps) pre-folded (bf16)
    # o_ref:    (tm, tn) f32   output tile; also the base-matmul accumulator
    # xa_ref:   (tm, r_pad) f32  LoRA down-projection accumulator (scratch)
    j = pl.program_id(1)
    k = pl.program_id(2)
    nk = pl.num_programs(2)

    x = x_ref[...]
    tk = x.shape[1]

    # ---- Base linear: accumulate x @ W^T straight into the resident output tile.
    base = jnp.dot(x, wt_ref[...], preferred_element_type=jnp.float32)

    @pl.when(k == 0)
    def _():
        o_ref[...] = base            # assign at k==0: no zero-fill pass

    @pl.when(k > 0)
    def _():
        o_ref[...] += base

    # ---- AdaLoRA rank-r down-projection (tiny MXU work, K-accumulated).
    def _down_proj():
        k_off = pl.multiple_of(k * tk, tk)
        xa = jnp.dot(x, ae_t_ref[pl.ds(k_off, tk), :],
                     preferred_element_type=jnp.float32)

        @pl.when(k == 0)
        def _():
            xa_ref[...] = xa

        @pl.when(k > 0)
        def _():
            xa_ref[...] += xa

    if reuse_xa_across_j:
        # Compute xa only on the first j sweep of this i-tile; xa_ref persists in
        # scratch across the (sequential, "arbitrary") j axis and is reused for
        # every j>0 tile of the same i.  Requires j NOT to be megacore-sharded.
        @pl.when(j == 0)
        def _():
            _down_proj()
    else:
        _down_proj()

    # ---- Epilogue: rank-r up-projection + bias, once per (i, j) tile.
    @pl.when(k == nk - 1)
    def _():
        lora = jnp.dot(xa_ref[...].astype(bt_ref.dtype), bt_ref[...],
                       preferred_element_type=jnp.float32)
        o_ref[...] += lora + b_ref[...]


def prepare_svdquant_params(weight, bias, lora_A, lora_E, lora_B, scaling, ranknum,
                            *, tn=512, tk=1024, compute_dtype=jnp.bfloat16):
    """One-time (model-load) parameter preparation.

    Folds the AdaLoRA scaling into B^T, transposes, zero-pads every weight-side
    dimension to its tile multiple and casts to the MXU compute dtype, so the
    per-call path touches only the activations.

    weight: [N, K] dequantized GPTQ weight, bias: [N],
    lora_A: [r, K], lora_E: [r, 1], lora_B: [N, r].
    """
    N, K = weight.shape
    r = lora_A.shape[0]
    scale = jnp.float32(scaling) / (jnp.float32(ranknum) + jnp.float32(1e-5))
    r_pad = max(128, _round_up(r, 128))

    w_t = weight.T                                   # [K, N]
    ae_t = (lora_A * lora_E).T                       # [K, r]
    b_t = lora_B.T * scale                           # [r, N]  (scaling pre-folded)

    w_tp = _pad_to(_pad_to(w_t, 0, tk), 1, tn).astype(compute_dtype)
    ae_tp = _pad_to(_pad_to(ae_t, 0, tk), 1, r_pad).astype(compute_dtype)
    b_tp = _pad_to(_pad_to(b_t, 0, r_pad), 1, tn).astype(compute_dtype)
    bias2 = _pad_to(bias.reshape(1, N).astype(jnp.float32), 1, tn)

    return dict(w_tp=w_tp, bias2=bias2, ae_tp=ae_tp, b_tp=b_tp,
                K=K, N=N, tn=tn, tk=tk, r_pad=r_pad, compute_dtype=compute_dtype)


def svdquant_linear(x, params, *, tm=256, reuse_xa_across_j=True,
                    vmem_limit_bytes=None):
    """x: [B, S, K] f32 -> [B, S, N] f32.

    Tile guidance:
      v6e: tm=512, tn=1024, tk>=1024 pay off; raise vmem_limit_bytes to 64-96 MiB.
      v7x: 64 MiB VMEM, 2 TCs -> tm=256/tn=512/tk=1024; make sure the "parallel"
           grid (i, and j if reuse_xa_across_j=False) has >=2 points per core,
           otherwise one TC idles.  For small M prefer reuse_xa_across_j=False so
           the j axis can be megacore-sharded.
      v5e: 128-multiples are enough (tn=tk=256-512); the lean f32 epilogue and the
           removed acc->o copy matter most here (single vst slot).
    """
    B, S, K = x.shape
    assert K == params["K"]
    M = B * S
    tn, tk, r_pad = params["tn"], params["tk"], params["r_pad"]
    compute_dtype = params["compute_dtype"]
    w_tp, bias2, ae_tp, b_tp = (params["w_tp"], params["bias2"],
                                params["ae_tp"], params["b_tp"])
    Kp, Np = w_tp.shape

    # Small-M handling: do not pad M up to tm; use a full-extent M block instead.
    tm_eff = min(tm, _round_up(M, 16))
    Mp = _round_up(M, tm_eff)

    x2 = _pad_to(_pad_to(x.reshape(M, K), 0, tm_eff), 1, tk).astype(compute_dtype)
    grid = (Mp // tm_eff, Np // tn, Kp // tk)

    # With xa reused across j, the j axis must stay sequential ("arbitrary");
    # otherwise megacore sharding of j would skip the j==0 down-projection.
    dim_sem = (("parallel", "arbitrary", "arbitrary") if reuse_xa_across_j
               else ("parallel", "parallel", "arbitrary"))

    kernel = functools.partial(_svdquant_kernel,
                               reuse_xa_across_j=reuse_xa_across_j)

    out2 = pl.pallas_call(
        kernel,
        out_shape=jax.ShapeDtypeStruct((Mp, Np), jnp.float32),
        grid_spec=pltpu.PrefetchScalarGridSpec(
            num_scalar_prefetch=0,
            grid=grid,
            in_specs=[
                pl.BlockSpec((tm_eff, tk), lambda i, j, k: (i, k)),     # x
                pl.BlockSpec((tk, tn), lambda i, j, k: (k, j)),         # W^T
                pl.BlockSpec((1, tn), lambda i, j, k: (0, j)),          # bias
                pl.BlockSpec((Kp, r_pad), lambda i, j, k: (0, 0)),      # (A*E)^T (resident)
                pl.BlockSpec((r_pad, tn), lambda i, j, k: (0, j)),      # scaled B^T
            ],
            out_specs=pl.BlockSpec((tm_eff, tn), lambda i, j, k: (i, j)),
            scratch_shapes=[
                pltpu.VMEM((tm_eff, r_pad), jnp.float32),   # LoRA down-proj accumulator
            ],
        ),
        compiler_params=pltpu.CompilerParams(
            dimension_semantics=dim_sem,
            vmem_limit_bytes=vmem_limit_bytes,
        ),
    )(x2, w_tp, bias2, ae_tp, b_tp)

    return out2[:M, :params["N"]].reshape(B, S, params["N"])


if __name__ == "__main__":
    # Small deterministic configuration consistent with the module's __init__.
    # Shapes intentionally do NOT divide the tile sizes, to exercise padding.
    batch, seq = 2, 8
    in_features, out_features = 384, 384
    r, lora_alpha = 8, 1

    key = jax.random.PRNGKey(0)
    kx, kw, kb, ka, ke, kbb = jax.random.split(key, 6)

    x = jax.random.normal(kx, (batch, seq, in_features), dtype=jnp.float32)

    # Base quant linear (dequantized weight + bias), deterministic init.
    weight = 0.05 * jax.random.normal(kw, (out_features, in_features), dtype=jnp.float32)
    bias = 0.05 * jax.random.normal(kb, (out_features,), dtype=jnp.float32)

    # AdaLoRA parameters: lora_A [r, in], lora_E [r, 1], lora_B [out, r].
    # (Real init sets lora_E to zeros; small randoms exercise the LoRA path.)
    lora_A = 0.02 * jax.random.normal(ka, (r, in_features), dtype=jnp.float32)
    lora_E = 0.02 * jax.random.normal(ke, (r, 1), dtype=jnp.float32)
    lora_B = 0.02 * jax.random.normal(kbb, (out_features, r), dtype=jnp.float32)
    scaling = float(lora_alpha) if lora_alpha > 0 else float(r)
    ranknum = float(r)

    # One-time weight-side prep (small tiles so the demo grid has several points:
    # K=384 -> Kp=512 (2 k-steps), N=384 -> Np=512 (2 j-steps)).
    params = prepare_svdquant_params(weight, bias, lora_A, lora_E, lora_B,
                                     scaling, ranknum, tn=256, tk=256)

    # Run both xa-reuse modes (j "arbitrary" vs j "parallel") to exercise both paths.
    out = jax.block_until_ready(svdquant_linear(x, params, tm=128,
                                                reuse_xa_across_j=True))
    out_nr = jax.block_until_ready(svdquant_linear(x, params, tm=128,
                                                   reuse_xa_across_j=False))
    assert out.shape == (batch, seq, out_features)
    assert jnp.allclose(out, out_nr, atol=1e-5, rtol=1e-5), \
        float(jnp.max(jnp.abs(out - out_nr)))

    # Pure f32 reference with the exact torch semantics (kernel uses bf16 inputs
    # with f32 accumulation, so compare with a quantization-sized tolerance).
    x2 = x.reshape(-1, in_features)
    ref32 = x2 @ weight.T + bias
    ref32 = ref32 + (x2 @ (lora_A * lora_E).T @ lora_B.T) * scaling / (ranknum + 1e-5)
    ref32 = ref32.reshape(batch, seq, out_features)
    assert jnp.allclose(out, ref32, atol=5e-2, rtol=5e-2), \
        float(jnp.max(jnp.abs(out - ref32)))

    # Tight check against a reference computed with the same bf16-in / f32-acc recipe.
    scale = scaling / (ranknum + 1e-5)
    xb = x2.astype(jnp.bfloat16)
    w_t = weight.T
    ae_t = (lora_A * lora_E).T
    b_t = lora_B.T
    base_bf = jnp.dot(xb, w_t.astype(jnp.bfloat16), preferred_element_type=jnp.float32) + bias
    xa_bf = jnp.dot(xb, ae_t.astype(jnp.bfloat16), preferred_element_type=jnp.float32)
    lora_bf = jnp.dot(xa_bf.astype(jnp.bfloat16), (b_t * scale).astype(jnp.bfloat16),
                      preferred_element_type=jnp.float32)
    ref_bf = (base_bf + lora_bf).reshape(batch, seq, out_features)
    assert jnp.allclose(out, ref_bf, atol=2e-3, rtol=2e-3), \
        float(jnp.max(jnp.abs(out - ref_bf)))

    print("KERNEL_OK")
</pallas_src>

<mosaic_0001>
module attributes {stable_mosaic.version = 11 : i64} {
  func.func @_svdquant_kernel(%arg0: i32, %arg1: i32, %arg2: i32, %arg3: memref<16x256xbf16, #tpu.memory_space<vmem>>, %arg4: memref<256x256xbf16, #tpu.memory_space<vmem>>, %arg5: memref<1x256xf32, #tpu.memory_space<vmem>>, %arg6: memref<512x128xbf16, #tpu.memory_space<vmem>>, %arg7: memref<128x256xbf16, #tpu.memory_space<vmem>>, %arg8: memref<16x256xf32, #tpu.memory_space<vmem>>, %arg9: memref<16x128xf32, #tpu.memory_space<vmem>>) attributes {dimension_semantics = [#tpu.dimension_semantics<parallel>, #tpu.dimension_semantics<arbitrary>, #tpu.dimension_semantics<arbitrary>], iteration_bounds = array<i64: 1, 2, 2>, scalar_prefetch = 0 : i64, scratch_operands = 1 : i64, tpu.core_type = #tpu.core_type<tc>, window_params = [{transform_indices = @transform_0, window_bounds = array<i64: 16, 256>}, {transform_indices = @transform_1, window_bounds = array<i64: 256, 256>}, {transform_indices = @transform_2, window_bounds = array<i64: 1, 256>}, {pipeline_mode = #tpu.pipeline_mode<synchronous>, transform_indices = @transform_3, window_bounds = array<i64: 512, 128>}, {transform_indices = @transform_4, window_bounds = array<i64: 128, 256>}, {transform_indices = @transform_5, window_bounds = array<i64: 16, 256>}]} {
    %c0 = arith.constant 0 : index
    %c0_0 = arith.constant 0 : index
    %0 = vector.load %arg3[%c0, %c0_0] : memref<16x256xbf16, #tpu.memory_space<vmem>>, vector<16x256xbf16>
    %c0_1 = arith.constant 0 : index
    %c0_2 = arith.constant 0 : index
    %1 = vector.load %arg4[%c0_1, %c0_2] : memref<256x256xbf16, #tpu.memory_space<vmem>>, vector<256x256xbf16>
    %cst = arith.constant dense<0.000000e+00> : vector<16x256xf32>
    %2 = tpu.matmul %0, %1, %cst {dimension_numbers = #tpu.dot_dimension_numbers<[1], [0], [0], [1], [0, 0, 1, 1], [], []>} : vector<16x256xbf16>, vector<256x256xbf16>, vector<16x256xf32> -> vector<16x256xf32>
    %c0_i32 = arith.constant 0 : i32
    %3 = arith.cmpi eq, %arg2, %c0_i32 : i32
    %4 = arith.extui %3 : i1 to i32
    %c0_i32_3 = arith.constant 0 : i32
    %5 = arith.cmpi ne, %4, %c0_i32_3 : i32
    scf.if %5 {
      %c0_9 = arith.constant 0 : index
      %c0_10 = arith.constant 0 : index
      %15 = vector.load %arg8[%c0_9, %c0_10] : memref<16x256xf32, #tpu.memory_space<vmem>>, vector<16x256xf32>
      tpu.vector_store %arg8[%c0_9, %c0_10], %2 {strides = array<i32>} : memref<16x256xf32, #tpu.memory_space<vmem>>, vector<16x256xf32>,
    } else {
    }
    %c0_i32_4 = arith.constant 0 : i32
    %6 = arith.cmpi sgt, %arg2, %c0_i32_4 : i32
    %7 = arith.extui %6 : i1 to i32
    %c0_i32_5 = arith.constant 0 : i32
    %8 = arith.cmpi ne, %7, %c0_i32_5 : i32
    scf.if %8 {
      %c0_9 = arith.constant 0 : index
      %c0_10 = arith.constant 0 : index
      %15 = vector.load %arg8[%c0_9, %c0_10] : memref<16x256xf32, #tpu.memory_space<vmem>>, vector<16x256xf32>
      %16 = arith.addf %15, %2 : vector<16x256xf32>
      %c0_11 = arith.constant 0 : index
      %c0_12 = arith.constant 0 : index
      %17 = vector.load %arg8[%c0_11, %c0_12] : memref<16x256xf32, #tpu.memory_space<vmem>>, vector<16x256xf32>
      tpu.vector_store %arg8[%c0_11, %c0_12], %16 {strides = array<i32>} : memref<16x256xf32, #tpu.memory_space<vmem>>, vector<16x256xf32>,
    } else {
    }
    %c0_i32_6 = arith.constant 0 : i32
    %9 = arith.cmpi eq, %arg1, %c0_i32_6 : i32
    %10 = arith.extui %9 : i1 to i32
    %c0_i32_7 = arith.constant 0 : i32
    %11 = arith.cmpi ne, %10, %c0_i32_7 : i32
    scf.if %11 {
      %c256_i32 = arith.constant 256 : i32
      %15 = arith.muli %arg2, %c256_i32 : i32
      %16 = tpu.assume_multiple %15, 256 : i32
      %17 = arith.index_cast %16 : i32 to index
      %c0_9 = arith.constant 0 : index
      %18 = vector.load %arg6[%17, %c0_9] : memref<512x128xbf16, #tpu.memory_space<vmem>>, vector<256x128xbf16>
      %cst_10 = arith.constant dense<0.000000e+00> : vector<16x128xf32>
      %19 = tpu.matmul %0, %18, %cst_10 {dimension_numbers = #tpu.dot_dimension_numbers<[1], [0], [0], [1], [0, 0, 1, 1], [], []>} : vector<16x256xbf16>, vector<256x128xbf16>, vector<16x128xf32> -> vector<16x128xf32>
      %c0_i32_11 = arith.constant 0 : i32
      %20 = arith.cmpi eq, %arg2, %c0_i32_11 : i32
      %21 = arith.extui %20 : i1 to i32
      %c0_i32_12 = arith.constant 0 : i32
      %22 = arith.cmpi ne, %21, %c0_i32_12 : i32
      scf.if %22 {
        %c0_15 = arith.constant 0 : index
        %c0_16 = arith.constant 0 : index
        %26 = vector.load %arg9[%c0_15, %c0_16] : memref<16x128xf32, #tpu.memory_space<vmem>>, vector<16x128xf32>
        tpu.vector_store %arg9[%c0_15, %c0_16], %19 {strides = array<i32>} : memref<16x128xf32, #tpu.memory_space<vmem>>, vector<16x128xf32>,
      } else {
      }
      %c0_i32_13 = arith.constant 0 : i32
      %23 = arith.cmpi sgt, %arg2, %c0_i32_13 : i32
      %24 = arith.extui %23 : i1 to i32
      %c0_i32_14 = arith.constant 0 : i32
      %25 = arith.cmpi ne, %24, %c0_i32_14 : i32
      scf.if %25 {
        %c0_15 = arith.constant 0 : index
        %c0_16 = arith.constant 0 : index
        %26 = vector.load %arg9[%c0_15, %c0_16] : memref<16x128xf32, #tpu.memory_space<vmem>>, vector<16x128xf32>
        %27 = arith.addf %26, %19 : vector<16x128xf32>
        %c0_17 = arith.constant 0 : index
        %c0_18 = arith.constant 0 : index
        %28 = vector.load %arg9[%c0_17, %c0_18] : memref<16x128xf32, #tpu.memory_space<vmem>>, vector<16x128xf32>
        tpu.vector_store %arg9[%c0_17, %c0_18], %27 {strides = array<i32>} : memref<16x128xf32, #tpu.memory_space<vmem>>, vector<16x128xf32>,
      } else {
      }
    } else {
    }
    %c1_i32 = arith.constant 1 : i32
    %12 = arith.cmpi eq, %arg2, %c1_i32 : i32
    %13 = arith.extui %12 : i1 to i32
    %c0_i32_8 = arith.constant 0 : i32
    %14 = arith.cmpi ne, %13, %c0_i32_8 : i32
    scf.if %14 {
      %c0_9 = arith.constant 0 : index
      %c0_10 = arith.constant 0 : index
      %15 = vector.load %arg9[%c0_9, %c0_10] : memref<16x128xf32, #tpu.memory_space<vmem>>, vector<16x128xf32>
      %16 = arith.truncf %15 : vector<16x128xf32> to vector<16x128xbf16>
      %c0_11 = arith.constant 0 : index
      %c0_12 = arith.constant 0 : index
      %17 = vector.load %arg7[%c0_11, %c0_12] : memref<128x256xbf16, #tpu.memory_space<vmem>>, vector<128x256xbf16>
      %cst_13 = arith.constant dense<0.000000e+00> : vector<16x256xf32>
      %18 = tpu.matmul %16, %17, %cst_13 {dimension_numbers = #tpu.dot_dimension_numbers<[1], [0], [0], [1], [0, 0, 1, 1], [], []>} : vector<16x128xbf16>, vector<128x256xbf16>, vector<16x256xf32> -> vector<16x256xf32>
      %c0_14 = arith.constant 0 : index
      %c0_15 = arith.constant 0 : index
      %19 = vector.load %arg8[%c0_14, %c0_15] : memref<16x256xf32, #tpu.memory_space<vmem>>, vector<16x256xf32>
      %c0_16 = arith.constant 0 : index
      %c0_17 = arith.constant 0 : index
      %20 = vector.load %arg5[%c0_16, %c0_17] : memref<1x256xf32, #tpu.memory_space<vmem>>, vector<1x256xf32>
      %21 = vector.broadcast %20 : vector<1x256xf32> to vector<16x256xf32>
      %22 = arith.addf %18, %21 : vector<16x256xf32>
      %23 = arith.addf %19, %22 : vector<16x256xf32>
      %c0_18 = arith.constant 0 : index
      %c0_19 = arith.constant 0 : index
      %24 = vector.load %arg8[%c0_18, %c0_19] : memref<16x256xf32, #tpu.memory_space<vmem>>, vector<16x256xf32>
      tpu.vector_store %arg8[%c0_18, %c0_19], %23 {strides = array<i32>} : memref<16x256xf32, #tpu.memory_space<vmem>>, vector<16x256xf32>,
    } else {
    }
    return
  }
  func.func @transform_0(%arg0: i32, %arg1: i32, %arg2: i32) -> (i32, i32) {
    %c0_i32 = arith.constant 0 : i32
    return %arg0, %arg2 : i32, i32
  }
  func.func @transform_1(%arg0: i32, %arg1: i32, %arg2: i32) -> (i32, i32) {
    %c0_i32 = arith.constant 0 : i32
    return %arg2, %arg1 : i32, i32
  }
  func.func @transform_2(%arg0: i32, %arg1: i32, %arg2: i32) -> (i32, i32) {
    %c0_i32 = arith.constant 0 : i32
    %c0_i32_0 = arith.constant 0 : i32
    return %c0_i32, %arg1 : i32, i32
  }
  func.func @transform_3(%arg0: i32, %arg1: i32, %arg2: i32) -> (i32, i32) {
    %c0_i32 = arith.constant 0 : i32
    %c0_i32_0 = arith.constant 0 : i32
    %c0_i32_1 = arith.constant 0 : i32
    return %c0_i32, %c0_i32_0 : i32, i32
  }
  func.func @transform_4(%arg0: i32, %arg1: i32, %arg2: i32) -> (i32, i32) {
    %c0_i32 = arith.constant 0 : i32
    %c0_i32_0 = arith.constant 0 : i32
    return %c0_i32, %arg1 : i32, i32
  }
  func.func @transform_5(%arg0: i32, %arg1: i32, %arg2: i32) -> (i32, i32) {
    %c0_i32 = arith.constant 0 : i32
    return %arg0, %arg1 : i32, i32
  }
}

</mosaic_0001>

<llo_original>
// kernel: tpu_custom_call.1
$region0: #{tpu_custom_call.1}
  #allocation0 [shape = 'u32[]', space=smem, size = 0x4, offset = 0x4, fixed_abs, tag = 'smem constant byte address 0x4 - core index']
  #allocation1 [shape = 'u32[144,128]{1,0:T(1,128)}', space=vmem, size = 0x12000, scoped, tag = 'internal scratch']
  #allocation2 [shape = 'f32[16,128]{1,0:T(8,128)}', space=vmem, size = 0x2000, scoped, tag = 'scratch operand']
  %s0 = inlined_call_operand.hbm [shape: bf16[16,512], index: 0, kind: input, shape index: {}]
  %s1 = inlined_call_operand.hbm [shape: bf16[512,512], index: 1, kind: input, shape index: {}]
  %s2 = inlined_call_operand.vmem [shape: f32[1,512], index: 2, kind: input, shape index: {}]
  %s3 = inlined_call_operand.hbm [shape: bf16[512,128], index: 3, kind: input, shape index: {}]
  %s4 = inlined_call_operand.hbm [shape: bf16[128,512], index: 4, kind: input, shape index: {}]
  %s5 = inlined_call_operand.hbm [shape: f32[16,512], index: 5, kind: output, shape index: {}]
  %s6 = sld [smem:[#allocation0]]
  $region93: #{tpu_custom_call.1} parent=0
    _
  %s8 = ssub.s32 1, %s6
  %s9 = scalar_select 0, %s8, %s6
  $region1: #{tpu_custom_call.1} parent=0
    #allocation3 [shape = 'u8[16384]{0}', space=vmem, size = 0x4000, scoped, tag = 'input window, operand 0']
    #allocation4 [shape = 's32[2]{0}', space=sflag, size = 0x8, scoped, tag = 'scoped memory for tpu_custom_call.1']
    #allocation5 [shape = 's32[2]{0}', space=sflag, size = 0x8, scoped, tag = 'scoped memory for tpu_custom_call.1']
    #allocation6 [shape = 'u8[262144]{0}', space=vmem, size = 0x40000, scoped, tag = 'input window, operand 1']
    #allocation7 [shape = 's32[2]{0}', space=sflag, size = 0x8, scoped, tag = 'scoped memory for tpu_custom_call.1']
    #allocation8 [shape = 'u8[131072]{0}', space=vmem, size = 0x20000, scoped, tag = 'input window, operand 3, single buffered']
    #allocation9 [shape = 'u8[131072]{0}', space=vmem, size = 0x20000, scoped, tag = 'input window, operand 4']
    #allocation10 [shape = 's32[2]{0}', space=sflag, size = 0x8, scoped, tag = 'scoped memory for tpu_custom_call.1']
    #allocation11 [shape = 'u8[32768]{0}', space=vmem, size = 0x8000, scoped, tag = 'output window, operand 0']
    %10 = vsyncpa [#allocation4], 0
    %s11 = scalar_lea.sflag [#allocation4], 1
    %12 = vsyncpa %s11, 0
    %13 = vsyncpa [#allocation7], 0
    %s14 = scalar_lea.sflag [#allocation7], 1
    %15 = vsyncpa %s14, 0
    %16 = vsyncpa [#allocation10], 0
    %s17 = scalar_lea.sflag [#allocation10], 1
    %18 = vsyncpa %s17, 0
    %19 = vsyncpa [#allocation5], 0
    %s20 = scalar_lea.sflag [#allocation5], 1
    %21 = vsyncpa %s20, 0
    loop: start=0, step=1, limit=6
    $region2: #{tpu_custom_call.1} parent=1 // loop_pre_header
      _
    $region3: #{tpu_custom_call.1} parent=1 // loop_header
      %s23 = sphi 0, %s27
      %p24 = scmp.ge.s32.totalorder %s23, 6
      %s30 = sphi 0, %s49
      %s31 = sphi 0, %s45
      %s32 = sphi 0, %s41
      %s33 = sphi 0, %s30
      %s34 = sphi 0, %s31
      %s35 = sphi 0, %s32
      %s36 = sphi 0, %s33
      %s37 = sphi 0, %s34
      %s38 = sphi 0, %s35
      %s54 = sphi 0, %s56
      %s57 = sphi 0, %s54
      %s58 = sphi 0, %s57
      %s74 = sphi 0, %s58
      %s82 = sphi 0, %s84
      %s85 = sphi 0, %s82
      %s86 = sphi 0, %s85
      %s102 = sphi 0, %s86
      %s108 = sphi 0, %s110
      %s111 = sphi 0, %s108
      %s112 = sphi 0, %s111
      %s128 = sphi 0, %s112
      %s132 = sphi 0, %s132
      %s134 = sphi 0, %s132
      %s135 = sphi 0, %s134
      %s149 = sphi 0, %s135
      %s155 = sphi 0, %s157
      %s158 = sphi 0, %s155
      %s159 = sphi 0, %s158
      %s175 = sphi 0, %s159
      %s183 = sphi 0, %s185
      %s186 = sphi 0, %s183
      %s187 = sphi 0, %s186
      %s203 = sphi 0, %s187
    $region4: #{tpu_custom_call.1} parent=1 // loop_header_branch
      %26 = sbr.rel (%p24) target = $region8
    $region5: #{tpu_custom_call.1} parent=1 // loop_body
      %s28 = ssub.s32 %s23, 1
      %s29 = ssub.s32 %s23, 2
      %s39 = sadd.s32 1, %s32
      %p40 = scmp.ge.s32.totalorder %s39, 2
      %s41 = scalar_select %p40, 0, %s39
      %s42 = sadd.s32 1, %s31
      %s43 = scalar_select %p40, %s42, %s31
      %p44 = scmp.ge.s32.totalorder %s43, 2
      %s45 = scalar_select %p44, 0, %s43
      %s46 = sadd.s32 1, %s30
      %s47 = scalar_select %p44, %s46, %s30
      %p48 = scmp.ge.s32.totalorder %s47, 1
      %s49 = scalar_select %p48, 0, %s47
      %s50 = ssub.s32 %s30, %s49
      %s51 = ssub.s32 %s32, %s41
      %s52 = sor.u32 %s50, %s51
      %p53 = scmp.eq.s32.totalorder %s52, 0
      %s55 = sadd.s32 %s54, 1
      %s56 = scalar_select %p53, %s54, %s55
      %p59 = pneg %p53
      %p60 = scmp.eq.s32.totalorder %s23, 3
      %p61 = por %p59, %p60
      %p62 = scmp.ne.s32.totalorder %s54, %s57
      %p63 = scmp.eq.s32.totalorder %s23, 0
      %p64 = por %p62, %p63
      %p65 = scmp.ne.s32.totalorder %s54, %s57
      %p66 = scmp.eq.s32.totalorder %s28, 3
      %p67 = por %p65, %p66
      %p68 = scmp.ne.s32.totalorder %s57, %s58
      %p69 = scmp.eq.s32.totalorder %s28, 0
      %p70 = por %p68, %p69
      %p71 = scmp.ne.s32.totalorder %s57, %s58
      %p72 = scmp.eq.s32.totalorder %s29, 3
      %p73 = por %p71, %p72
      %p75 = scmp.ne.s32.totalorder %s58, %s74
      %p76 = scmp.eq.s32.totalorder %s29, 0
      %p77 = por %p75, %p76
      %s78 = ssub.s32 %s32, %s41
      %s79 = ssub.s32 %s31, %s45
      %s80 = sor.u32 %s78, %s79
      %p81 = scmp.eq.s32.totalorder %s80, 0
      %s83 = sadd.s32 %s82, 1
      %s84 = scalar_select %p81, %s82, %s83
      %p87 = pneg %p81
      %p88 = scmp.eq.s32.totalorder %s23, 3
      %p89 = por %p87, %p88
      %p90 = scmp.ne.s32.totalorder %s82, %s85
      %p91 = scmp.eq.s32.totalorder %s23, 0
      %p92 = por %p90, %p91
      %p93 = scmp.ne.s32.totalorder %s82, %s85
      %p94 = scmp.eq.s32.totalorder %s28, 3
      %p95 = por %p93, %p94
      %p96 = scmp.ne.s32.totalorder %s85, %s86
      %p97 = scmp.eq.s32.totalorder %s28, 0
      %p98 = por %p96, %p97
      %p99 = scmp.ne.s32.totalorder %s85, %s86
      %p100 = scmp.eq.s32.totalorder %s29, 3
      %p101 = por %p99, %p100
      %p103 = scmp.ne.s32.totalorder %s86, %s102
      %p104 = scmp.eq.s32.totalorder %s29, 0
      %p105 = por %p103, %p104
      %s106 = ssub.s32 %s31, %s45
      %p107 = scmp.eq.s32.totalorder %s106, 0
      %s109 = sadd.s32 %s108, 1
      %s110 = scalar_select %p107, %s108, %s109
      %p113 = pneg %p107
      %p114 = scmp.eq.s32.totalorder %s23, 3
      %p115 = por %p113, %p114
      %p116 = scmp.ne.s32.totalorder %s108, %s111
      %p117 = scmp.eq.s32.totalorder %s23, 0
      %p118 = por %p116, %p117
      %p119 = scmp.ne.s32.totalorder %s108, %s111
      %p120 = scmp.eq.s32.totalorder %s28, 3
      %p121 = por %p119, %p120
      %p122 = scmp.ne.s32.totalorder %s111, %s112
      %p123 = scmp.eq.s32.totalorder %s28, 0
      %p124 = por %p122, %p123
      %p125 = scmp.ne.s32.totalorder %s111, %s112
      %p126 = scmp.eq.s32.totalorder %s29, 3
      %p127 = por %p125, %p126
      %p129 = scmp.ne.s32.totalorder %s112, %s128
      %p130 = scmp.eq.s32.totalorder %s29, 0
      %p131 = por %p129, %p130
      %s133 = sadd.s32 %s132, 1
      %p136 = scmp.eq.s32.totalorder %s23, 3
      %p137 = scmp.ne.s32.totalorder %s132, %s134
      %p138 = scmp.eq.s32.totalorder %s23, 0
      %p139 = por %p137, %p138
      %p140 = scmp.ne.s32.totalorder %s132, %s134
      %p141 = scmp.eq.s32.totalorder %s28, 3
      %p142 = por %p140, %p141
      %p143 = scmp.ne.s32.totalorder %s134, %s135
      %p144 = scmp.eq.s32.totalorder %s28, 0
      %p145 = por %p143, %p144
      %p146 = scmp.ne.s32.totalorder %s134, %s135
      %p147 = scmp.eq.s32.totalorder %s29, 3
      %p148 = por %p146, %p147
      %p150 = scmp.ne.s32.totalorder %s135, %s149
      %p151 = scmp.eq.s32.totalorder %s29, 0
      %p152 = por %p150, %p151
      %s153 = ssub.s32 %s31, %s45
      %p154 = scmp.eq.s32.totalorder %s153, 0
      %s156 = sadd.s32 %s155, 1
      %s157 = scalar_select %p154, %s155, %s156
      %p160 = pneg %p154
      %p161 = scmp.eq.s32.totalorder %s23, 3
      %p162 = por %p160, %p161
      %p163 = scmp.ne.s32.totalorder %s155, %s158
      %p164 = scmp.eq.s32.totalorder %s23, 0
      %p165 = por %p163, %p164
      %p166 = scmp.ne.s32.totalorder %s155, %s158
      %p167 = scmp.eq.s32.totalorder %s28, 3
      %p168 = por %p166, %p167
      %p169 = scmp.ne.s32.totalorder %s158, %s159
      %p170 = scmp.eq.s32.totalorder %s28, 0
      %p171 = por %p169, %p170
      %p172 = scmp.ne.s32.totalorder %s158, %s159
      %p173 = scmp.eq.s32.totalorder %s29, 3
      %p174 = por %p172, %p173
      %p176 = scmp.ne.s32.totalorder %s159, %s175
      %p177 = scmp.eq.s32.totalorder %s29, 0
      %p178 = por %p176, %p177
      %s179 = ssub.s32 %s30, %s49
      %s180 = ssub.s32 %s31, %s45
      %s181 = sor.u32 %s179, %s180
      %p182 = scmp.eq.s32.totalorder %s181, 0
      %s184 = sadd.s32 %s183, 1
      %s185 = scalar_select %p182, %s183, %s184
      %p188 = pneg %p182
      %p189 = scmp.eq.s32.totalorder %s23, 3
      %p190 = por %p188, %p189
      %p191 = scmp.ne.s32.totalorder %s183, %s186
      %p192 = scmp.eq.s32.totalorder %s23, 0
      %p193 = por %p191, %p192
      %p194 = scmp.ne.s32.totalorder %s183, %s186
      %p195 = scmp.eq.s32.totalorder %s28, 3
      %p196 = por %p194, %p195
      %p197 = scmp.ne.s32.totalorder %s186, %s187
      %p198 = scmp.eq.s32.totalorder %s28, 0
      %p199 = por %p197, %p198
      %p200 = scmp.ne.s32.totalorder %s186, %s187
      %p201 = scmp.eq.s32.totalorder %s29, 3
      %p202 = por %p200, %p201
      %p204 = scmp.ne.s32.totalorder %s187, %s203
      %p205 = scmp.eq.s32.totalorder %s29, 0
      %p206 = por %p204, %p205
      %p207 = scmp.le.s32.totalorder 1, %s23
      %p208 = scmp.lt.s32.totalorder %s23, 5
      %p209 = pnand %p207, %p208
      %p210 = pneg %p209
      // Predicated region
      $region9: #{tpu_custom_call.1} parent=5 // pred_check
        _
      $region10: #{tpu_custom_call.1} parent=5 // pred_check_branch
        %212 = sbr.rel (%p209) target = $region12
      $region11: #{tpu_custom_call.1} parent=5 // pred_region
        %s213 = ssub.s32 %s23, 1
        // Predicated region
        $region13: #{tpu_custom_call.1} parent=11 // pred_check
          %p214 = pneg %p145
        $region14: #{tpu_custom_call.1} parent=11 // pred_check_branch
          %216 = sbr.rel (%p214) target = $region16
        $region15: #{tpu_custom_call.1} parent=11 // pred_region
          %s218 = ssub.s32 4096, 4096
          %219 = vsyncadd [#allocation7], %s218
          %s220 = sshll.u32 [#allocation8], 4
          %s221 = int_to_ptr.vmem [resolvable:$true] %s220
          %226 = dma.hbm_to_vmem [thread:$0]  %s3, 4096, %s221, [#allocation7], 64, 64, 4
        $region16: #{tpu_custom_call.1} parent=11 // pred_fallthru
          _
      $region12: #{tpu_custom_call.1} parent=5 // pred_fallthru
        _
      %p227 = scmp.lt.s32.totalorder %s23, 4
      // Predicated region
      $region17: #{tpu_custom_call.1} parent=5 // pred_check
        %p228 = pneg %p227
      $region18: #{tpu_custom_call.1} parent=5 // pred_check_branch
        %230 = sbr.rel (%p228) target = $region20
      $region19: #{tpu_custom_call.1} parent=5 // pred_region
        // Predicated region
        $region21: #{tpu_custom_call.1} parent=19 // pred_check
          %p231 = pneg %p64
        $region22: #{tpu_custom_call.1} parent=19 // pred_check_branch
          %233 = sbr.rel (%p231) target = $region24
        $region23: #{tpu_custom_call.1} parent=19 // pred_region
          %s234 = sand.u32 %s54, 1
          %s235 = scalar_lea.sflag [#allocation4], %s234
          %s236 = sand.u32 %s54, 1
          %s237 = smul.addr %s236, 16
          %s238 = scalar_lea.vmem [#allocation3], %s237
          %s239 = smul.u32 2, %s30
          %s240 = smul.u32 2, %s32
          %s242 = ssub.s32 256, 256
          %243 = vsyncadd %s235, %s242
          %s244 = smul.addr %s239, 4
          %s245 = sadd.s32 %s240, %s244
          %s246 = smul.addr %s245, 64
          %s247 = scalar_lea.hbm %s0, %s246
          %s248 = sshll.u32 %s238, 4
          %s249 = int_to_ptr.vmem [resolvable:$true] %s248
          %254 = dma.hbm_to_vmem [thread:$0]  %s247, 256, %s249, %s235, 256, 128, 8
        $region24: #{tpu_custom_call.1} parent=19 // pred_fallthru
          _
        // Predicated region
        $region25: #{tpu_custom_call.1} parent=19 // pred_check
          %p255 = pneg %p92
        $region26: #{tpu_custom_call.1} parent=19 // pred_check_branch
          %257 = sbr.rel (%p255) target = $region28
        $region27: #{tpu_custom_call.1} parent=19 // pred_region
          %s258 = sand.u32 %s23, 1
          %s259 = scalar_lea.sflag [#allocation7], %s258
          %s260 = sand.u32 %s82, 1
          %s261 = smul.addr %s260, 256
          %s262 = scalar_lea.vmem [#allocation6], %s261
          %s263 = smul.u32 32, %s32
          %s264 = smul.u32 2, %s31
          %s266 = ssub.s32 4096, 4096
          %267 = vsyncadd %s259, %s266
          %s268 = smul.addr %s263, 4
          %s269 = sadd.s32 %s264, %s268
          %s270 = smul.addr %s269, 64
          %s271 = scalar_lea.hbm %s1, %s270
          %s272 = sshll.u32 %s262, 4
          %s273 = int_to_ptr.vmem [resolvable:$true] %s272
          %278 = dma.hbm_to_vmem [thread:$0]  %s271, 4096, %s273, %s259, 256, 128, 8
        $region28: #{tpu_custom_call.1} parent=19 // pred_fallthru
          _
        // Predicated region
        $region29: #{tpu_custom_call.1} parent=19 // pred_check
          %p279 = pneg %p118
        $region30: #{tpu_custom_call.1} parent=19 // pred_check_branch
          %281 = sbr.rel (%p279) target = $region32
        $region31: #{tpu_custom_call.1} parent=19 // pred_region
          %s282 = smul.u32 2, %s31
          %p283 = scmp.lt.s32.totalorder %s282, 3
          %s284 = scalar_select %p283, %s282, 3
          %s285 = scalar_lea.vmem %s2, %s284
          %s286 = smul.u32 2, %s31
        $region32: #{tpu_custom_call.1} parent=19 // pred_fallthru
          _
        // Predicated region
        $region33: #{tpu_custom_call.1} parent=19 // pred_check
          %p287 = pneg %p165
        $region34: #{tpu_custom_call.1} parent=19 // pred_check_branch
          %289 = sbr.rel (%p287) target = $region36
        $region35: #{tpu_custom_call.1} parent=19 // pred_region
          %s290 = sand.u32 %s155, 1
          %s291 = scalar_lea.sflag [#allocation10], %s290
          %s292 = sand.u32 %s155, 1
          %s293 = smul.addr %s292, 128
          %s294 = scalar_lea.vmem [#allocation9], %s293
          %s295 = smul.u32 2, %s31
          %s297 = ssub.s32 2048, 2048
          %298 = vsyncadd %s291, %s297
          %s299 = smul.addr %s295, 64
          %s300 = scalar_lea.hbm %s4, %s299
          %s301 = sshll.u32 %s294, 4
          %s302 = int_to_ptr.vmem [resolvable:$true] %s301
          %307 = dma.hbm_to_vmem [thread:$0]  %s300, 2048, %s302, %s291, 256, 128, 8
        $region36: #{tpu_custom_call.1} parent=19 // pred_fallthru
          _
      $region20: #{tpu_custom_call.1} parent=5 // pred_fallthru
        _
      %p308 = scmp.le.s32.totalorder 1, %s23
      %p309 = scmp.lt.s32.totalorder %s23, 5
      %p310 = pnand %p308, %p309
      %p311 = pneg %p310
      // Predicated region
      $region37: #{tpu_custom_call.1} parent=5 // pred_check
        _
      $region38: #{tpu_custom_call.1} parent=5 // pred_check_branch
        %313 = sbr.rel (%p310) target = $region40
      $region39: #{tpu_custom_call.1} parent=5 // pred_region
        %s314 = ssub.s32 %s23, 1
        %s315 = sand.u32 %s57, 1
        %s316 = scalar_lea.sflag [#allocation4], %s315
        %s317 = sand.u32 %s57, 1
        %s318 = smul.addr %s317, 16
        %s319 = scalar_lea.vmem [#allocation3], %s318
        // Predicated region
        $region41: #{tpu_custom_call.1} parent=39 // pred_check
          %p320 = pneg %p70
        $region42: #{tpu_custom_call.1} parent=39 // pred_check_branch
          %322 = sbr.rel (%p320) target = $region44
        $region43: #{tpu_custom_call.1} parent=39 // pred_region
          %323 = dma.done %s316, 256
        $region44: #{tpu_custom_call.1} parent=39 // pred_fallthru
          _
        %s324 = sand.u32 %s28, 1
        %s325 = scalar_lea.sflag [#allocation7], %s324
        %s326 = sand.u32 %s85, 1
        %s327 = smul.addr %s326, 256
        %s328 = scalar_lea.vmem [#allocation6], %s327
        // Predicated region
        $region45: #{tpu_custom_call.1} parent=39 // pred_check
          %p329 = pneg %p98
        $region46: #{tpu_custom_call.1} parent=39 // pred_check_branch
          %331 = sbr.rel (%p329) target = $region48
        $region47: #{tpu_custom_call.1} parent=39 // pred_region
          %332 = dma.done %s325, 4096
        $region48: #{tpu_custom_call.1} parent=39 // pred_fallthru
          _
        // Predicated region
        $region49: #{tpu_custom_call.1} parent=39 // pred_check
          %p333 = pneg %p145
        $region50: #{tpu_custom_call.1} parent=39 // pred_check_branch
          %335 = sbr.rel (%p333) target = $region52
        $region51: #{tpu_custom_call.1} parent=39 // pred_region
          %336 = dma.done [#allocation7], 4096
        $region52: #{tpu_custom_call.1} parent=39 // pred_fallthru
          _
        %s337 = sand.u32 %s158, 1
        %s338 = scalar_lea.sflag [#allocation10], %s337
        %s339 = sand.u32 %s158, 1
        %s340 = smul.addr %s339, 128
        %s341 = scalar_lea.vmem [#allocation9], %s340
        // Predicated region
        $region53: #{tpu_custom_call.1} parent=39 // pred_check
          %p342 = pneg %p171
        $region54: #{tpu_custom_call.1} parent=39 // pred_check_branch
          %344 = sbr.rel (%p342) target = $region56
        $region55: #{tpu_custom_call.1} parent=39 // pred_region
          %345 = dma.done %s338, 2048
        $region56: #{tpu_custom_call.1} parent=39 // pred_fallthru
          _
        %s346 = sand.u32 %s57, 1
        %s347 = scalar_lea.sflag [#allocation4], %s346
        %s348 = sand.u32 %s57, 1
        %s349 = smul.addr %s348, 16
        %s350 = scalar_lea.vmem [#allocation3], %s349
        %p351 = pneg %p70
        %p352 = pneg %p67
        %s353 = sand.u32 %s28, 1
        %s354 = scalar_lea.sflag [#allocation7], %s353
        %s355 = sand.u32 %s85, 1
        %s356 = smul.addr %s355, 256
        %s357 = scalar_lea.vmem [#allocation6], %s356
        %p358 = pneg %p98
        %p359 = pneg %p95
        %s360 = smul.u32 2, %s34
        %p361 = scmp.lt.s32.totalorder %s360, 3
        %s362 = scalar_select %p361, %s360, 3
        %s363 = scalar_lea.vmem %s2, %s362
        %p364 = pneg %p124
        %p365 = pneg %p121
        %p366 = pneg %p145
        %p367 = pneg %p142
        %s368 = sand.u32 %s158, 1
        %s369 = scalar_lea.sflag [#allocation10], %s368
        %s370 = sand.u32 %s158, 1
        %s371 = smul.addr %s370, 128
        %s372 = scalar_lea.vmem [#allocation9], %s371
        %p373 = pneg %p171
        %p374 = pneg %p168
        %p375 = pneg %p199
        %p376 = pneg %p196
        %s377 = sand.u32 %s186, 1
        %s378 = scalar_lea.sflag [#allocation5], %s377
        %s379 = sand.u32 %s186, 1
        %s380 = smul.addr %s379, 32
        %s381 = scalar_lea.vmem [#allocation11], %s380
        %s382 = smul.u32 2, %s33
        %s383 = smul.u32 2, %s35
        %s384 = smul.u32 32, %s35
        %s385 = smul.u32 2, %s34
        %s386 = smul.u32 2, %s34
        %p387 = scmp.lt.s32.totalorder %s386, 3
        %s388 = scalar_select %p387, %s386, 3
        %s389 = scalar_lea.vmem %s2, %s388
        %s390 = smul.u32 2, %s34
        %s391 = smul.u32 2, %s34
        %s392 = smul.u32 2, %s33
        %s393 = smul.u32 2, %s34
        %v395 = vld [vmem:[%s319] sm:$0xff]
        %v396 = vld [vmem:[%s319 + $0x8] sm:$0xff]
        %v397 = vld [vmem:[%s328] sm:$0xff]
        %v398 = vld [vmem:[%s328 + $0x8] sm:$0xff]
        %v399 = vld [vmem:[%s328 + $0x10] sm:$0xff]
        %v400 = vld [vmem:[%s328 + $0x18] sm:$0xff]
        %v401 = vld [vmem:[%s328 + $0x20] sm:$0xff]
        %v402 = vld [vmem:[%s328 + $0x28] sm:$0xff]
        %v403 = vld [vmem:[%s328 + $0x30] sm:$0xff]
        %v404 = vld [vmem:[%s328 + $0x38] sm:$0xff]
        %v405 = vld [vmem:[%s328 + $0x40] sm:$0xff]
        %v406 = vld [vmem:[%s328 + $0x48] sm:$0xff]
        %v407 = vld [vmem:[%s328 + $0x50] sm:$0xff]
        %v408 = vld [vmem:[%s328 + $0x58] sm:$0xff]
        %v409 = vld [vmem:[%s328 + $0x60] sm:$0xff]
        %v410 = vld [vmem:[%s328 + $0x68] sm:$0xff]
        %v411 = vld [vmem:[%s328 + $0x70] sm:$0xff]
        %v412 = vld [vmem:[%s328 + $0x78] sm:$0xff]
        %v413 = vld [vmem:[%s328 + $0x80] sm:$0xff]
        %v414 = vld [vmem:[%s328 + $0x88] sm:$0xff]
        %v415 = vld [vmem:[%s328 + $0x90] sm:$0xff]
        %v416 = vld [vmem:[%s328 + $0x98] sm:$0xff]
        %v417 = vld [vmem:[%s328 + $0xa0] sm:$0xff]
        %v418 = vld [vmem:[%s328 + $0xa8] sm:$0xff]
        %v419 = vld [vmem:[%s328 + $0xb0] sm:$0xff]
        %v420 = vld [vmem:[%s328 + $0xb8] sm:$0xff]
        %v421 = vld [vmem:[%s328 + $0xc0] sm:$0xff]
        %v422 = vld [vmem:[%s328 + $0xc8] sm:$0xff]
        %v423 = vld [vmem:[%s328 + $0xd0] sm:$0xff]
        %v424 = vld [vmem:[%s328 + $0xd8] sm:$0xff]
        %v425 = vld [vmem:[%s328 + $0xe0] sm:$0xff]
        %v426 = vld [vmem:[%s328 + $0xe8] sm:$0xff]
        %v427 = vld [vmem:[%s328 + $0xf0] sm:$0xff]
        %v428 = vld [vmem:[%s328 + $0xf8] sm:$0xff]
        %v431 = vunpack.c.l.b16 %v395
        %v432 = vunpack.c.h.b16 %v395
        %v433 = vunpack.c.l.b16 %v396
        %v434 = vunpack.c.h.b16 %v396
        %v435 = vpack.c.b16 %v433, %v431
        %v436 = vpack.c.b16 %v434, %v432
        %v471 = vunpack.c.l.b16 %v397
        %v472 = vunpack.c.h.b16 %v397
        %v473 = vunpack.c.l.b16 %v398
        %v474 = vunpack.c.h.b16 %v398
        %v475 = vunpack.c.l.b16 %v399
        %v476 = vunpack.c.h.b16 %v399
        %v477 = vunpack.c.l.b16 %v400
        %v478 = vunpack.c.h.b16 %v400
        %v479 = vunpack.c.l.b16 %v401
        %v480 = vunpack.c.h.b16 %v401
        %v481 = vunpack.c.l.b16 %v402
        %v482 = vunpack.c.h.b16 %v402
        %v483 = vunpack.c.l.b16 %v403
        %v484 = vunpack.c.h.b16 %v403
        %v485 = vunpack.c.l.b16 %v404
        %v486 = vunpack.c.h.b16 %v404
        %v487 = vunpack.c.l.b16 %v405
        %v488 = vunpack.c.h.b16 %v405
        %v489 = vunpack.c.l.b16 %v406
        %v490 = vunpack.c.h.b16 %v406
        %v491 = vunpack.c.l.b16 %v407
        %v492 = vunpack.c.h.b16 %v407
        %v493 = vunpack.c.l.b16 %v408
        %v494 = vunpack.c.h.b16 %v408
        %v495 = vunpack.c.l.b16 %v409
        %v496 = vunpack.c.h.b16 %v409
        %v497 = vunpack.c.l.b16 %v410
        %v498 = vunpack.c.h.b16 %v410
        %v499 = vunpack.c.l.b16 %v411
        %v500 = vunpack.c.h.b16 %v411
        %v501 = vunpack.c.l.b16 %v412
        %v502 = vunpack.c.h.b16 %v412
        %v503 = vunpack.c.l.b16 %v413
        %v504 = vunpack.c.h.b16 %v413
        %v505 = vunpack.c.l.b16 %v414
        %v506 = vunpack.c.h.b16 %v414
        %v507 = vunpack.c.l.b16 %v415
        %v508 = vunpack.c.h.b16 %v415
        %v509 = vunpack.c.l.b16 %v416
        %v510 = vunpack.c.h.b16 %v416
        %v511 = vunpack.c.l.b16 %v417
        %v512 = vunpack.c.h.b16 %v417
        %v513 = vunpack.c.l.b16 %v418
        %v514 = vunpack.c.h.b16 %v418
        %v515 = vunpack.c.l.b16 %v419
        %v516 = vunpack.c.h.b16 %v419
        %v517 = vunpack.c.l.b16 %v420
        %v518 = vunpack.c.h.b16 %v420
        %v519 = vunpack.c.l.b16 %v421
        %v520 = vunpack.c.h.b16 %v421
        %v521 = vunpack.c.l.b16 %v422
        %v522 = vunpack.c.h.b16 %v422
        %v523 = vunpack.c.l.b16 %v423
        %v524 = vunpack.c.h.b16 %v423
        %v525 = vunpack.c.l.b16 %v424
        %v526 = vunpack.c.h.b16 %v424
        %v527 = vunpack.c.l.b16 %v425
        %v528 = vunpack.c.h.b16 %v425
        %v529 = vunpack.c.l.b16 %v426
        %v530 = vunpack.c.h.b16 %v426
        %v531 = vunpack.c.l.b16 %v427
        %v532 = vunpack.c.h.b16 %v427
        %v533 = vunpack.c.l.b16 %v428
        %v534 = vunpack.c.h.b16 %v428
        %v535 = vpack.c.b16 %v473, %v471
        %v536 = vpack.c.b16 %v474, %v472
        %v537 = vpack.c.b16 %v477, %v475
        %v538 = vpack.c.b16 %v478, %v476
        %v539 = vpack.c.b16 %v481, %v479
        %v540 = vpack.c.b16 %v482, %v480
        %v541 = vpack.c.b16 %v485, %v483
        %v542 = vpack.c.b16 %v486, %v484
        %v543 = vpack.c.b16 %v489, %v487
        %v544 = vpack.c.b16 %v490, %v488
        %v545 = vpack.c.b16 %v493, %v491
        %v546 = vpack.c.b16 %v494, %v492
        %v547 = vpack.c.b16 %v497, %v495
        %v548 = vpack.c.b16 %v498, %v496
        %v549 = vpack.c.b16 %v501, %v499
        %v550 = vpack.c.b16 %v502, %v500
        %v551 = vpack.c.b16 %v505, %v503
        %v552 = vpack.c.b16 %v506, %v504
        %v553 = vpack.c.b16 %v509, %v507
        %v554 = vpack.c.b16 %v510, %v508
        %v555 = vpack.c.b16 %v513, %v511
        %v556 = vpack.c.b16 %v514, %v512
        %v557 = vpack.c.b16 %v517, %v515
        %v558 = vpack.c.b16 %v518, %v516
        %v559 = vpack.c.b16 %v521, %v519
        %v560 = vpack.c.b16 %v522, %v520
        %v561 = vpack.c.b16 %v525, %v523
        %v562 = vpack.c.b16 %v526, %v524
        %v563 = vpack.c.b16 %v529, %v527
        %v564 = vpack.c.b16 %v530, %v528
        %v565 = vpack.c.b16 %v533, %v531
        %v566 = vpack.c.b16 %v534, %v532
        %599 = vmatprep.subr.bf16.mxu0 %v536
        %600 = vmatpush1.bf16.msra.mxu0 %v535
        %601 = vmatprep.subr.bf16.mxu0 %v538
        %602 = vmatpush1.bf16.msra.mxu0 %v537
        %603 = vmatprep.subr.bf16.mxu0 %v540
        %604 = vmatpush1.bf16.msra.mxu0 %v539
        %605 = vmatprep.subr.bf16.mxu0 %v542
        %606 = vmatpush1.bf16.msra.mxu0 %v541
        %607 = vmatprep.subr.bf16.mxu0 %v544
        %608 = vmatpush1.bf16.msra.mxu0 %v543
        %609 = vmatprep.subr.bf16.mxu0 %v546
        %610 = vmatpush1.bf16.msra.mxu0 %v545
        %611 = vmatprep.subr.bf16.mxu0 %v548
        %612 = vmatpush1.bf16.msra.mxu0 %v547
        %613 = vmatprep.subr.bf16.mxu0 %v550
        %614 = vmatpush1.bf16.msra.mxu0 %v549
        %615 = vmatprep.subr.bf16.mxu0 %v552
        %616 = vmatpush1.bf16.msra.mxu0 %v551
        %617 = vmatprep.subr.bf16.mxu0 %v554
        %618 = vmatpush1.bf16.msra.mxu0 %v553
        %619 = vmatprep.subr.bf16.mxu0 %v556
        %620 = vmatpush1.bf16.msra.mxu0 %v555
        %621 = vmatprep.subr.bf16.mxu0 %v558
        %622 = vmatpush1.bf16.msra.mxu0 %v557
        %623 = vmatprep.subr.bf16.mxu0 %v560
        %624 = vmatpush1.bf16.msra.mxu0 %v559
        %625 = vmatprep.subr.bf16.mxu0 %v562
        %626 = vmatpush1.bf16.msra.mxu0 %v561
        %627 = vmatprep.subr.bf16.mxu0 %v564
        %628 = vmatpush1.bf16.msra.mxu0 %v563
        %629 = vmatprep.subr.bf16.mxu0 %v566
        %630 = vmatpush1.bf16.msra.mxu0 %v565
        %631 = vmatprep.mubr.bf16.mxu0 %v436
        %632 = vmatmul.mubr.bf16.gmra.mrb[0].mxu0 %v435
        %v633 = vpop.f32.mrb[0].mxu0
        %v634 = vadd.f32 0.0, %v633
        %v635 = vpop.f32.mrb[0].mxu0
        %v636 = vadd.f32 0.0, %v635
        %v637 = vpop.f32.mrb[0].mxu0
        %v638 = vadd.f32 0.0, %v637
        %v639 = vpop.f32.mrb[0].mxu0
        %v640 = vadd.f32 0.0, %v639
        %641 = vdwg.mxu0
        %p642 = scmp.eq.s32.totalorder %s35, 0
        // Predicated region
        $region57: #{tpu_custom_call.1} parent=39 // pred_check
          %p643 = pneg %p642
        $region58: #{tpu_custom_call.1} parent=39 // pred_check_branch
          %645 = sbr.rel (%p643) target = $region60
        $region59: #{tpu_custom_call.1} parent=39 // pred_region
          %646 = vst [vmem:[%s381] sm:$0xff] %v634
          %647 = vst [vmem:[%s381 + $0x8] sm:$0xff] %v636
          %648 = vst [vmem:[%s381 + $0x10] sm:$0xff] %v638
          %649 = vst [vmem:[%s381 + $0x18] sm:$0xff] %v640
        $region60: #{tpu_custom_call.1} parent=39 // pred_fallthru
          _
        %p650 = scmp.gt.s32.totalorder %s35, 0
        // Predicated region
        $region61: #{tpu_custom_call.1} parent=39 // pred_check
          %p651 = pneg %p650
        $region62: #{tpu_custom_call.1} parent=39 // pred_check_branch
          %653 = sbr.rel (%p651) target = $region64
        $region63: #{tpu_custom_call.1} parent=39 // pred_region
          %v654 = vld [vmem:[%s381] sm:$0xff]
          %v655 = vld [vmem:[%s381 + $0x8] sm:$0xff]
          %v656 = vld [vmem:[%s381 + $0x10] sm:$0xff]
          %v657 = vld [vmem:[%s381 + $0x18] sm:$0xff]
          %v658 = vadd.f32 %v654, %v634
          %v659 = vadd.f32 %v655, %v636
          %v660 = vadd.f32 %v656, %v638
          %v661 = vadd.f32 %v657, %v640
          %662 = vst [vmem:[%s381] sm:$0xff] %v658
          %663 = vst [vmem:[%s381 + $0x8] sm:$0xff] %v659
          %664 = vst [vmem:[%s381 + $0x10] sm:$0xff] %v660
          %665 = vst [vmem:[%s381 + $0x18] sm:$0xff] %v661
        $region64: #{tpu_custom_call.1} parent=39 // pred_fallthru
          _
        %p666 = scmp.eq.s32.totalorder %s34, 0
        // Predicated region
        $region65: #{tpu_custom_call.1} parent=39 // pred_check
          %p667 = pneg %p666
        $region66: #{tpu_custom_call.1} parent=39 // pred_check_branch
          %669 = sbr.rel (%p667) target = $region68
        $region67: #{tpu_custom_call.1} parent=39 // pred_region
          %s670 = smul.u32 %s35, 256
          %s671 = sshra.s32 %s670, 3
          %s672 = sand.u32 %s670, 7
          %s673 = smul.addr %s671, 4
          %s674 = scalar_lea.vmem [#allocation8], %s673
          %v675 = vld [vmem:[%s674] sm:$0xf]
          %v676 = vld [vmem:[%s674 + $0x4] sm:$0xf]
          %v677 = vld [vmem:[%s674 + $0x8] sm:$0xf]
          %v678 = vld [vmem:[%s674 + $0xc] sm:$0xf]
          %v679 = vld [vmem:[%s674 + $0x10] sm:$0xf]
          %v680 = vld [vmem:[%s674 + $0x14] sm:$0xf]
          %v681 = vld [vmem:[%s674 + $0x18] sm:$0xf]
          %v682 = vld [vmem:[%s674 + $0x1c] sm:$0xf]
          %v683 = vld [vmem:[%s674 + $0x20] sm:$0xf]
          %v684 = vld [vmem:[%s674 + $0x24] sm:$0xf]
          %v685 = vld [vmem:[%s674 + $0x28] sm:$0xf]
          %v686 = vld [vmem:[%s674 + $0x2c] sm:$0xf]
          %v687 = vld [vmem:[%s674 + $0x30] sm:$0xf]
          %v688 = vld [vmem:[%s674 + $0x34] sm:$0xf]
          %v689 = vld [vmem:[%s674 + $0x38] sm:$0xf]
          %v690 = vld [vmem:[%s674 + $0x3c] sm:$0xf]
          %v691 = vld [vmem:[%s674 + $0x40] sm:$0xf]
          %v692 = vld [vmem:[%s674 + $0x44] sm:$0xf]
          %v693 = vld [vmem:[%s674 + $0x48] sm:$0xf]
          %v694 = vld [vmem:[%s674 + $0x4c] sm:$0xf]
          %v695 = vld [vmem:[%s674 + $0x50] sm:$0xf]
          %v696 = vld [vmem:[%s674 + $0x54] sm:$0xf]
          %v697 = vld [vmem:[%s674 + $0x58] sm:$0xf]
          %v698 = vld [vmem:[%s674 + $0x5c] sm:$0xf]
          %v699 = vld [vmem:[%s674 + $0x60] sm:$0xf]
          %v700 = vld [vmem:[%s674 + $0x64] sm:$0xf]
          %v701 = vld [vmem:[%s674 + $0x68] sm:$0xf]
          %v702 = vld [vmem:[%s674 + $0x6c] sm:$0xf]
          %v703 = vld [vmem:[%s674 + $0x70] sm:$0xf]
          %v704 = vld [vmem:[%s674 + $0x74] sm:$0xf]
          %v705 = vld [vmem:[%s674 + $0x78] sm:$0xf]
          %v706 = vld [vmem:[%s674 + $0x7c] sm:$0xf]
          %v739 = vunpack.c.l.b16 %v675
          %v740 = vunpack.c.l.b16 %v676
          %v741 = vunpack.c.l.b16 %v677
          %v742 = vunpack.c.l.b16 %v678
          %v743 = vunpack.c.l.b16 %v679
          %v744 = vunpack.c.l.b16 %v680
          %v745 = vunpack.c.l.b16 %v681
          %v746 = vunpack.c.l.b16 %v682
          %v747 = vunpack.c.l.b16 %v683
          %v748 = vunpack.c.l.b16 %v684
          %v749 = vunpack.c.l.b16 %v685
          %v750 = vunpack.c.l.b16 %v686
          %v751 = vunpack.c.l.b16 %v687
          %v752 = vunpack.c.l.b16 %v688
          %v753 = vunpack.c.l.b16 %v689
          %v754 = vunpack.c.l.b16 %v690
          %v755 = vunpack.c.l.b16 %v691
          %v756 = vunpack.c.l.b16 %v692
          %v757 = vunpack.c.l.b16 %v693
          %v758 = vunpack.c.l.b16 %v694
          %v759 = vunpack.c.l.b16 %v695
          %v760 = vunpack.c.l.b16 %v696
          %v761 = vunpack.c.l.b16 %v697
          %v762 = vunpack.c.l.b16 %v698
          %v763 = vunpack.c.l.b16 %v699
          %v764 = vunpack.c.l.b16 %v700
          %v765 = vunpack.c.l.b16 %v701
          %v766 = vunpack.c.l.b16 %v702
          %v767 = vunpack.c.l.b16 %v703
          %v768 = vunpack.c.l.b16 %v704
          %v769 = vunpack.c.l.b16 %v705
          %v770 = vunpack.c.l.b16 %v706
          %v771 = vpack.c.b16 %v740, %v739
          %v772 = vpack.c.b16 %v742, %v741
          %v773 = vpack.c.b16 %v744, %v743
          %v774 = vpack.c.b16 %v746, %v745
          %v775 = vpack.c.b16 %v748, %v747
          %v776 = vpack.c.b16 %v750, %v749
          %v777 = vpack.c.b16 %v752, %v751
          %v778 = vpack.c.b16 %v754, %v753
          %v779 = vpack.c.b16 %v756, %v755
          %v780 = vpack.c.b16 %v758, %v757
          %v781 = vpack.c.b16 %v760, %v759
          %v782 = vpack.c.b16 %v762, %v761
          %v783 = vpack.c.b16 %v764, %v763
          %v784 = vpack.c.b16 %v766, %v765
          %v785 = vpack.c.b16 %v768, %v767
          %v786 = vpack.c.b16 %v770, %v769
          %803 = vmatprep.subr.bf16.mxu0 0
          %804 = vmatpush1.bf16.msra.mxu0 %v771
          %805 = vmatprep.subr.bf16.mxu0 0
          %806 = vmatpush1.bf16.msra.mxu0 %v772
          %807 = vmatprep.subr.bf16.mxu0 0
          %808 = vmatpush1.bf16.msra.mxu0 %v773
          %809 = vmatprep.subr.bf16.mxu0 0
          %810 = vmatpush1.bf16.msra.mxu0 %v774
          %811 = vmatprep.subr.bf16.mxu0 0
          %812 = vmatpush1.bf16.msra.mxu0 %v775
          %813 = vmatprep.subr.bf16.mxu0 0
          %814 = vmatpush1.bf16.msra.mxu0 %v776
          %815 = vmatprep.subr.bf16.mxu0 0
          %816 = vmatpush1.bf16.msra.mxu0 %v777
          %817 = vmatprep.subr.bf16.mxu0 0
          %818 = vmatpush1.bf16.msra.mxu0 %v778
          %819 = vmatprep.subr.bf16.mxu0 0
          %820 = vmatpush1.bf16.msra.mxu0 %v779
          %821 = vmatprep.subr.bf16.mxu0 0
          %822 = vmatpush1.bf16.msra.mxu0 %v780
          %823 = vmatprep.subr.bf16.mxu0 0
          %824 = vmatpush1.bf16.msra.mxu0 %v781
          %825 = vmatprep.subr.bf16.mxu0 0
          %826 = vmatpush1.bf16.msra.mxu0 %v782
          %827 = vmatprep.subr.bf16.mxu0 0
          %828 = vmatpush1.bf16.msra.mxu0 %v783
          %829 = vmatprep.subr.bf16.mxu0 0
          %830 = vmatpush1.bf16.msra.mxu0 %v784
          %831 = vmatprep.subr.bf16.mxu0 0
          %832 = vmatpush1.bf16.msra.mxu0 %v785
          %833 = vmatprep.subr.bf16.mxu0 0
          %834 = vmatpush1.bf16.msra.mxu0 %v786
          %835 = vmatprep.mubr.bf16.mxu0 %v436
          %836 = vmatmul.mubr.bf16.gmra.mrb[0].mxu0 %v435
          %v837 = vpop.f32.mrb[0].mxu0
          %v838 = vadd.f32 0.0, %v837
          %v839 = vpop.f32.mrb[0].mxu0
          %v840 = vpop.f32.mrb[0].mxu0
          %v841 = vadd.f32 0.0, %v840
          %v842 = vpop.f32.mrb[0].mxu0
          %843 = vdwg.mxu0
          // Predicated region
          $region69: #{tpu_custom_call.1} parent=67 // pred_check
            %p844 = pneg %p642
          $region70: #{tpu_custom_call.1} parent=67 // pred_check_branch
            %846 = sbr.rel (%p844) target = $region72
          $region71: #{tpu_custom_call.1} parent=67 // pred_region
            %847 = vst [vmem:[#allocation2] sm:$0xff] %v838
            %848 = vst [vmem:[#allocation2 + $0x8] sm:$0xff] %v841
          $region72: #{tpu_custom_call.1} parent=67 // pred_fallthru
            _
          // Predicated region
          $region73: #{tpu_custom_call.1} parent=67 // pred_check
            %p849 = pneg %p650
          $region74: #{tpu_custom_call.1} parent=67 // pred_check_branch
            %851 = sbr.rel (%p849) target = $region76
          $region75: #{tpu_custom_call.1} parent=67 // pred_region
            %v852 = vld [vmem:[#allocation2] sm:$0xff]
            %v853 = vld [vmem:[#allocation2 + $0x8] sm:$0xff]
            %v854 = vadd.f32 %v852, %v838
            %v855 = vadd.f32 %v853, %v841
            %856 = vst [vmem:[#allocation2] sm:$0xff] %v854
            %857 = vst [vmem:[#allocation2 + $0x8] sm:$0xff] %v855
          $region76: #{tpu_custom_call.1} parent=67 // pred_fallthru
            _
        $region68: #{tpu_custom_call.1} parent=39 // pred_fallthru
          _
        %p858 = scmp.eq.s32.totalorder %s35, 1
        // Predicated region
        $region77: #{tpu_custom_call.1} parent=39 // pred_check
          %p859 = pneg %p858
        $region78: #{tpu_custom_call.1} parent=39 // pred_check_branch
          %861 = sbr.rel (%p859) target = $region80
        $region79: #{tpu_custom_call.1} parent=39 // pred_region
          %v862 = vld [vmem:[#allocation2] sm:$0xff]
          %v863 = vld [vmem:[#allocation2 + $0x8] sm:$0xff]
          %v864 = vpack.c.bf16 %v863, %v862
          %v865 = vld [vmem:[%s341] sm:$0xff]
          %v866 = vld [vmem:[%s341 + $0x8] sm:$0xff]
          %v867 = vld [vmem:[%s341 + $0x10] sm:$0xff]
          %v868 = vld [vmem:[%s341 + $0x18] sm:$0xff]
          %v869 = vld [vmem:[%s341 + $0x20] sm:$0xff]
          %v870 = vld [vmem:[%s341 + $0x28] sm:$0xff]
          %v871 = vld [vmem:[%s341 + $0x30] sm:$0xff]
          %v872 = vld [vmem:[%s341 + $0x38] sm:$0xff]
          %v873 = vld [vmem:[%s341 + $0x40] sm:$0xff]
          %v874 = vld [vmem:[%s341 + $0x48] sm:$0xff]
          %v875 = vld [vmem:[%s341 + $0x50] sm:$0xff]
          %v876 = vld [vmem:[%s341 + $0x58] sm:$0xff]
          %v877 = vld [vmem:[%s341 + $0x60] sm:$0xff]
          %v878 = vld [vmem:[%s341 + $0x68] sm:$0xff]
          %v879 = vld [vmem:[%s341 + $0x70] sm:$0xff]
          %v880 = vld [vmem:[%s341 + $0x78] sm:$0xff]
          %v881 = vld [vmem:[%s381] sm:$0xff]
          %v882 = vld [vmem:[%s381 + $0x8] sm:$0xff]
          %v883 = vld [vmem:[%s381 + $0x10] sm:$0xff]
          %v884 = vld [vmem:[%s381 + $0x18] sm:$0xff]
          %v885 = vld [vmem:[%s389] sm:$0x3]
          %v887 = vlaneseq
          %v888 = vshrl.u32 %v887, 7
          %v889 = vsub.s32 0, %v888
          %v890 = vrot.slane %v885, %v889
          %v891 = vlaneseq
          %v892 = vshrl.u32 %v891, 7
          %v893 = vsub.s32 1, %v892
          %v894 = vrot.slane %v885, %v893
          %v913 = vunpack.c.l.b16 %v865
          %v914 = vunpack.c.h.b16 %v865
          %v915 = vunpack.c.l.b16 %v866
          %v916 = vunpack.c.h.b16 %v866
          %v917 = vunpack.c.l.b16 %v867
          %v918 = vunpack.c.h.b16 %v867
          %v919 = vunpack.c.l.b16 %v868
          %v920 = vunpack.c.h.b16 %v868
          %v921 = vunpack.c.l.b16 %v869
          %v922 = vunpack.c.h.b16 %v869
          %v923 = vunpack.c.l.b16 %v870
          %v924 = vunpack.c.h.b16 %v870
          %v925 = vunpack.c.l.b16 %v871
          %v926 = vunpack.c.h.b16 %v871
          %v927 = vunpack.c.l.b16 %v872
          %v928 = vunpack.c.h.b16 %v872
          %v929 = vunpack.c.l.b16 %v873
          %v930 = vunpack.c.h.b16 %v873
          %v931 = vunpack.c.l.b16 %v874
          %v932 = vunpack.c.h.b16 %v874
          %v933 = vunpack.c.l.b16 %v875
          %v934 = vunpack.c.h.b16 %v875
          %v935 = vunpack.c.l.b16 %v876
          %v936 = vunpack.c.h.b16 %v876
          %v937 = vunpack.c.l.b16 %v877
          %v938 = vunpack.c.h.b16 %v877
          %v939 = vunpack.c.l.b16 %v878
          %v940 = vunpack.c.h.b16 %v878
          %v941 = vunpack.c.l.b16 %v879
          %v942 = vunpack.c.h.b16 %v879
          %v943 = vunpack.c.l.b16 %v880
          %v944 = vunpack.c.h.b16 %v880
          %v945 = vpack.c.b16 %v915, %v913
          %v946 = vpack.c.b16 %v916, %v914
          %v947 = vpack.c.b16 %v919, %v917
          %v948 = vpack.c.b16 %v920, %v918
          %v949 = vpack.c.b16 %v923, %v921
          %v950 = vpack.c.b16 %v924, %v922
          %v951 = vpack.c.b16 %v927, %v925
          %v952 = vpack.c.b16 %v928, %v926
          %v953 = vpack.c.b16 %v931, %v929
          %v954 = vpack.c.b16 %v932, %v930
          %v955 = vpack.c.b16 %v935, %v933
          %v956 = vpack.c.b16 %v936, %v934
          %v957 = vpack.c.b16 %v939, %v937
          %v958 = vpack.c.b16 %v940, %v938
          %v959 = vpack.c.b16 %v943, %v941
          %v960 = vpack.c.b16 %v944, %v942
          %977 = vmatprep.subr.bf16.mxu0 %v946
          %978 = vmatpush1.bf16.msra.mxu0 %v945
          %979 = vmatprep.subr.bf16.mxu0 %v948
          %980 = vmatpush1.bf16.msra.mxu0 %v947
          %981 = vmatprep.subr.bf16.mxu0 %v950
          %982 = vmatpush1.bf16.msra.mxu0 %v949
          %983 = vmatprep.subr.bf16.mxu0 %v952
          %984 = vmatpush1.bf16.msra.mxu0 %v951
          %985 = vmatprep.subr.bf16.mxu0 %v954
          %986 = vmatpush1.bf16.msra.mxu0 %v953
          %987 = vmatprep.subr.bf16.mxu0 %v956
          %988 = vmatpush1.bf16.msra.mxu0 %v955
          %989 = vmatprep.subr.bf16.mxu0 %v958
          %990 = vmatpush1.bf16.msra.mxu0 %v957
          %991 = vmatprep.subr.bf16.mxu0 %v960
          %992 = vmatpush1.bf16.msra.mxu0 %v959
          %993 = vmatprep.subr.bf16.mxu0 0
          %994 = vmatpush1.bf16.msra.mxu0 0
          %995 = vmatprep.subr.bf16.mxu0 0
          %996 = vmatpush1.bf16.msra.mxu0 0
          %997 = vmatprep.subr.bf16.mxu0 0
          %998 = vmatpush1.bf16.msra.mxu0 0
          %999 = vmatprep.subr.bf16.mxu0 0
          %1000 = vmatpush1.bf16.msra.mxu0 0
          %1001 = vmatprep.subr.bf16.mxu0 0
          %1002 = vmatpush1.bf16.msra.mxu0 0
          %1003 = vmatprep.subr.bf16.mxu0 0
          %1004 = vmatpush1.bf16.msra.mxu0 0
          %1005 = vmatprep.subr.bf16.mxu0 0
          %1006 = vmatpush1.bf16.msra.mxu0 0
          %1007 = vmatprep.subr.bf16.mxu0 0
          %1008 = vmatpush1.bf16.msra.mxu0 0
          %1009 = vmatprep.mubr.bf16.mxu0 0
          %1010 = vmatmul.mubr.bf16.gmra.mrb[0].mxu0 %v864
          %v1011 = vpop.f32.mrb[0].mxu0
          %v1012 = vadd.f32 %v890, %v1011
          %v1013 = vpop.f32.mrb[0].mxu0
          %v1014 = vadd.f32 %v894, %v1013
          %v1015 = vpop.f32.mrb[0].mxu0
          %v1016 = vadd.f32 %v890, %v1015
          %v1017 = vpop.f32.mrb[0].mxu0
          %v1018 = vadd.f32 %v894, %v1017
          %1019 = vdwg.mxu0
          %v1020 = vadd.f32 %v881, %v1012
          %v1021 = vadd.f32 %v882, %v1014
          %v1022 = vadd.f32 %v883, %v1016
          %v1023 = vadd.f32 %v884, %v1018
          %1024 = vst [vmem:[%s381] sm:$0xff] %v1020
          %1025 = vst [vmem:[%s381 + $0x8] sm:$0xff] %v1021
          %1026 = vst [vmem:[%s381 + $0x10] sm:$0xff] %v1022
          %1027 = vst [vmem:[%s381 + $0x18] sm:$0xff] %v1023
        $region80: #{tpu_custom_call.1} parent=39 // pred_fallthru
          _
        %s1028 = sand.u32 %s186, 1
        %s1029 = scalar_lea.sflag [#allocation5], %s1028
        %s1030 = sand.u32 %s186, 1
        %s1031 = smul.addr %s1030, 32
        %s1032 = scalar_lea.vmem [#allocation11], %s1031
        // Predicated region
        $region81: #{tpu_custom_call.1} parent=39 // pred_check
          %p1033 = pneg %p196
        $region82: #{tpu_custom_call.1} parent=39 // pred_check_branch
          %1035 = sbr.rel (%p1033) target = $region84
        $region83: #{tpu_custom_call.1} parent=39 // pred_region
          %s1036 = smul.u32 2, %s33
          %s1037 = smul.u32 2, %s34
          %s1039 = ssub.s32 512, 512
          %1040 = vsyncadd %s1029, %s1039
          %s1041 = smul.addr %s1036, 4
          %s1042 = sadd.s32 %s1037, %s1041
          %s1043 = smul.addr %s1042, 128
          %s1044 = scalar_lea.hbm %s5, %s1043
          %s1045 = sshll.u32 %s1032, 4
          %s1046 = int_to_ptr.vmem [resolvable:$true] %s1045
          %1051 = dma.vmem_to_hbm [thread:$0]  %s1046, 512, %s1044, %s1029, 256, 512, 16
        $region84: #{tpu_custom_call.1} parent=39 // pred_fallthru
          _
      $region40: #{tpu_custom_call.1} parent=5 // pred_fallthru
        _
      %p1052 = scmp.le.s32.totalorder 2, %s23
      // Predicated region
      $region85: #{tpu_custom_call.1} parent=5 // pred_check
        %p1053 = pneg %p1052
      $region86: #{tpu_custom_call.1} parent=5 // pred_check_branch
        %1055 = sbr.rel (%p1053) target = $region88
      $region87: #{tpu_custom_call.1} parent=5 // pred_region
        %s1056 = ssub.s32 %s23, 2
        // Predicated region
        $region89: #{tpu_custom_call.1} parent=87 // pred_check
          %p1057 = pneg %p202
        $region90: #{tpu_custom_call.1} parent=87 // pred_check_branch
          %1059 = sbr.rel (%p1057) target = $region92
        $region91: #{tpu_custom_call.1} parent=87 // pred_region
          %s1060 = sand.u32 %s187, 1
          %s1061 = scalar_lea.sflag [#allocation5], %s1060
          %s1062 = sand.u32 %s187, 1
          %s1063 = smul.addr %s1062, 32
          %s1064 = scalar_lea.vmem [#allocation11], %s1063
          %1065 = dma.done %s1061, 512
        $region92: #{tpu_custom_call.1} parent=87 // pred_fallthru
          _
      $region88: #{tpu_custom_call.1} parent=5 // pred_fallthru
        _
    $region6: #{tpu_custom_call.1} parent=1 // loop_footer
      %s27 = sadd.s32 1, %s23
    $region7: #{tpu_custom_call.1} parent=1 // loop_footer_branch
      %22 = sbr.rel target = $region3
    $region8: #{tpu_custom_call.1} parent=1 // loop_exit
      _
    %1066 = vsyncpa [#allocation4], 1
    %s1067 = scalar_lea.sflag [#allocation4], 1
    %1068 = vsyncpa %s1067, 1
    %1069 = vsyncpa [#allocation7], 1
    %s1070 = scalar_lea.sflag [#allocation7], 1
    %1071 = vsyncpa %s1070, 1
    %1072 = vsyncpa [#allocation10], 1
    %s1073 = scalar_lea.sflag [#allocation10], 1
    %1074 = vsyncpa %s1073, 1
    %1075 = vsyncpa [#allocation5], 1
    %s1076 = scalar_lea.sflag [#allocation5], 1
    %1077 = vsyncpa %s1076, 1

</llo_original>
